<compile_context>
chip_gen: v7x
topology: tpu7x:2x2x1
jax: 0.10.0
libtpu: 0.0.40
codegen_flags: <defaults>
</compile_context>

<pallas_src>
import functools

import jax
import jax.numpy as jnp
from jax.experimental import pallas as pl
from jax.experimental.pallas import tpu as pltpu


def _round_up(x, m):
    return (x + m - 1) // m * m


def _attention_text_kernel(u_ref, m_ref, w1_ref, b1_ref, w2_ref, b2_ref,
                           w3_ref, uatt_ref, wts_ref, *, activation_type):
    if activation_type == "tanh":
        act = jnp.tanh
    elif activation_type == "sigmoid":
        act = jax.nn.sigmoid
    else:
        raise ValueError(f"unknown activation_type {activation_type}")

    TB, N, D = u_ref.shape

    u3 = u_ref[...]                               # (TB, N, D), input dtype
    # Merge (batch, seq) so fc1 is a single tall MXU matmul. With N a multiple
    # of the 8-row f32 sublane tile this reshape is layout-preserving.
    u2 = u3.reshape(TB * N, D)
    m = m_ref[...]                                # (TB, D), input dtype

    w1 = w1_ref[...]                              # (D, D)  (pre-transposed)
    b1 = b1_ref[...]                              # (1, D)
    w2 = w2_ref[...]                              # (D, D)  (pre-transposed)
    b2 = b2_ref[...]                              # (1, D)
    w3 = w3_ref[...]                              # (1, D)  fc3 weight as a row

    # fc1 / fc2 on the MXU in the input dtype, f32 accumulation; activation in f32.
    # TODO(synk): dropout_rate ignored (eval mode); training dropout would need pltpu PRNG.
    wu2 = act(jnp.dot(u2, w1, preferred_element_type=jnp.float32)
              + b1.astype(jnp.float32))                         # (TB*N, D) f32
    wm = act(jnp.dot(m, w2, preferred_element_type=jnp.float32)
             + b2.astype(jnp.float32))                          # (TB, D)   f32

    wu3 = wu2.reshape(TB, N, D)                                 # (TB, N, D)

    # fc3 folded into the memory gate: a[t,n] = sum_d wu3[t,n,d]*wm[t,d]*w3[d]
    # VPU multiply + XLU lane reduce; no 1-wide MXU matmul, no b3 (cancels).
    g = wm * w3.astype(jnp.float32)                             # (TB, D)
    a3 = jnp.sum(wu3 * g[:, None, :], axis=-1, keepdims=True)   # (TB, N, 1)

    # Softmax over the sequence axis (dim=1 in torch).
    a_max = jnp.max(a3, axis=1, keepdims=True)                  # (TB, 1, 1)
    e3 = jnp.exp(a3 - a_max)                                    # (TB, N, 1)
    z3 = jnp.sum(e3, axis=1, keepdims=True)                     # (TB, 1, 1)
    weights3 = e3 / z3                                          # (TB, N, 1)

    # Attention-weighted encoding. The softmax denominator is a positive
    # per-row scalar, so it cancels under the l2norm -> use e3 directly.
    u_att = jnp.sum(e3 * u3.astype(jnp.float32), axis=1)        # (TB, D)
    u_att = u_att * jax.lax.rsqrt(
        jnp.sum(u_att * u_att, axis=-1, keepdims=True))

    uatt_ref[...] = u_att.astype(uatt_ref.dtype)
    wts_ref[...] = weights3.reshape(TB, N).astype(wts_ref.dtype)


def attention_text(u_t, m_u, params, *, activation_type="tanh",
                   block_batch=128):
    """u_t: (B, N, D), m_u: (B, D). Returns (u_att (B, D), weights (B, N))."""
    B, N, D = u_t.shape
    w1, b1, w2, b2, w3, _b3 = params   # b3 dropped: softmax is shift-invariant

    # Pre-transpose torch Linear weights (out, in) -> (in, out) for x @ W.
    w1_t = jnp.asarray(w1).T                      # (D, D)
    w2_t = jnp.asarray(w2).T                      # (D, D)
    w3_row = jnp.asarray(w3).reshape(1, D)        # (1, D), used on the VPU
    b1_2d = jnp.asarray(b1).reshape(1, D)
    b2_2d = jnp.asarray(b2).reshape(1, D)

    # Batch tile: multiple of 8 (full f32 sublanes); amortizes per-step
    # overhead. With large B this keeps many grid steps (v7x megacore).
    block_batch = max(8, _round_up(block_batch, 8))
    TB = min(block_batch, _round_up(B, 8))
    B_pad = _round_up(B, TB)
    if B_pad != B:
        u_t_p = jnp.pad(u_t, ((0, B_pad - B), (0, 0), (0, 0)))
        m_u_p = jnp.pad(m_u, ((0, B_pad - B), (0, 0)))
    else:
        u_t_p, m_u_p = u_t, m_u

    grid = (B_pad // TB,)
    kernel = functools.partial(_attention_text_kernel,
                               activation_type=activation_type)

    const = lambda shape: pl.BlockSpec(shape, lambda b: tuple(0 for _ in shape))

    itemsize = u_t.dtype.itemsize
    param_bytes = (w1_t.size + w2_t.size + w3_row.size
                   + b1_2d.size + b2_2d.size) * 4
    cost = pl.CostEstimate(
        flops=int(2 * B_pad * N * D * D + 2 * B_pad * D * D
                  + 4 * B_pad * N * D + 3 * B_pad * D),
        transcendentals=int(B_pad * N * D + B_pad * D + B_pad * N + B_pad),
        bytes_accessed=int(u_t_p.size * itemsize + m_u_p.size * itemsize
                           + param_bytes
                           + (B_pad * D + B_pad * N) * itemsize),
    )

    # VMEM: double-buffered blocks + f32 intermediates, generous headroom,
    # bounded so the request also fits v7x's smaller VMEM.
    vmem_est = (2 * TB * N * D * itemsize + 2 * TB * D * itemsize
                + 2 * (TB * D + TB * N) * itemsize
                + 2 * param_bytes + 6 * TB * N * D * 4)
    vmem_limit = int(min(max(32 * 1024 * 1024, 2 * vmem_est),
                         100 * 1024 * 1024))

    u_att, weights = pl.pallas_call(
        kernel,
        out_shape=(
            jax.ShapeDtypeStruct((B_pad, D), u_t.dtype),
            jax.ShapeDtypeStruct((B_pad, N), u_t.dtype),
        ),
        grid_spec=pltpu.PrefetchScalarGridSpec(
            num_scalar_prefetch=0,
            grid=grid,
            in_specs=[
                pl.BlockSpec((TB, N, D), lambda b: (b, 0, 0)),   # u_t tile
                pl.BlockSpec((TB, D), lambda b: (b, 0)),         # m_u tile
                const((D, D)),                                   # w1^T
                const((1, D)),                                   # b1
                const((D, D)),                                   # w2^T
                const((1, D)),                                   # b2
                const((1, D)),                                   # w3 row
            ],
            out_specs=[
                pl.BlockSpec((TB, D), lambda b: (b, 0)),         # u_att
                pl.BlockSpec((TB, N), lambda b: (b, 0)),         # weights
            ],
        ),
        compiler_params=pltpu.CompilerParams(
            dimension_semantics=("parallel",),
            vmem_limit_bytes=vmem_limit),
        cost_estimate=cost,
    )(u_t_p, m_u_p, w1_t, b1_2d, w2_t, b2_2d, w3_row)

    return u_att[:B], weights[:B]


def _reference(u_t, m_u, params, activation_type="tanh"):
    w1, b1, w2, b2, w3, b3 = params
    act = jnp.tanh if activation_type == "tanh" else jax.nn.sigmoid
    W_u = act(u_t @ w1.T + b1)                       # (B, N, D)
    W_u_m = act(m_u @ w2.T + b2)                     # (B, D)
    h_u = W_u * W_u_m[:, None, :]
    a_u = (h_u @ w3.T + b3)[..., 0]                  # (B, N)
    weights = jax.nn.softmax(a_u, axis=1)
    u_att = jnp.sum(weights[..., None] * u_t, axis=1)
    u_att = u_att / jnp.sqrt(jnp.sum(u_att ** 2, axis=-1, keepdims=True))
    return u_att, weights


if __name__ == "__main__":
    B, N, D = 2, 8, 32  # batch, seq (num words), embed_dim
    key = jax.random.PRNGKey(0)
    k_u, k_m, k_w1, k_b1, k_w2, k_b2, k_w3, k_b3 = jax.random.split(key, 8)

    u_t = jax.random.normal(k_u, (B, N, D), dtype=jnp.float32)
    m_u = jax.random.normal(k_m, (B, D), dtype=jnp.float32)

    # Deterministic parameter init (same shapes as the nn.Linear layers).
    s = 1.0 / jnp.sqrt(D)
    params = (
        jax.random.uniform(k_w1, (D, D), minval=-s, maxval=s),  # fc1.weight
        jax.random.uniform(k_b1, (D,), minval=-s, maxval=s),    # fc1.bias
        jax.random.uniform(k_w2, (D, D), minval=-s, maxval=s),  # fc2.weight
        jax.random.uniform(k_b2, (D,), minval=-s, maxval=s),    # fc2.bias
        jax.random.uniform(k_w3, (1, D), minval=-s, maxval=s),  # fc3.weight
        jax.random.uniform(k_b3, (1,), minval=-s, maxval=s),    # fc3.bias
    )

    for act_type in ("tanh", "sigmoid"):
        u_att, weights = attention_text(u_t, m_u, params,
                                        activation_type=act_type)
        jax.block_until_ready((u_att, weights))
        u_att_ref, weights_ref = _reference(u_t, m_u, params, act_type)
        assert u_att.shape == (B, D) and weights.shape == (B, N)
        assert jnp.allclose(u_att, u_att_ref, atol=1e-5, rtol=1e-5), act_type
        assert jnp.allclose(weights, weights_ref, atol=1e-5, rtol=1e-5), act_type

    print("KERNEL_OK")
</pallas_src>

<mosaic_0001>
module attributes {stable_mosaic.version = 11 : i64} {
  func.func @_attention_text_kernel(%arg0: i32, %arg1: memref<8x8x32xf32, #tpu.memory_space<vmem>>, %arg2: memref<8x32xf32, #tpu.memory_space<vmem>>, %arg3: memref<32x32xf32, #tpu.memory_space<vmem>>, %arg4: memref<1x32xf32, #tpu.memory_space<vmem>>, %arg5: memref<32x32xf32, #tpu.memory_space<vmem>>, %arg6: memref<1x32xf32, #tpu.memory_space<vmem>>, %arg7: memref<1x32xf32, #tpu.memory_space<vmem>>, %arg8: memref<8x32xf32, #tpu.memory_space<vmem>>, %arg9: memref<8x8xf32, #tpu.memory_space<vmem>>) attributes {dimension_semantics = [#tpu.dimension_semantics<parallel>], iteration_bounds = array<i64: 1>, scalar_prefetch = 0 : i64, scratch_operands = 0 : i64, tpu.core_type = #tpu.core_type<tc>, window_params = [{transform_indices = @transform_0, window_bounds = array<i64: 8, 8, 32>}, {transform_indices = @transform_1, window_bounds = array<i64: 8, 32>}, {pipeline_mode = #tpu.pipeline_mode<synchronous>, transform_indices = @transform_2, window_bounds = array<i64: 32, 32>}, {pipeline_mode = #tpu.pipeline_mode<synchronous>, transform_indices = @transform_3, window_bounds = array<i64: 1, 32>}, {pipeline_mode = #tpu.pipeline_mode<synchronous>, transform_indices = @transform_4, window_bounds = array<i64: 32, 32>}, {pipeline_mode = #tpu.pipeline_mode<synchronous>, transform_indices = @transform_5, window_bounds = array<i64: 1, 32>}, {pipeline_mode = #tpu.pipeline_mode<synchronous>, transform_indices = @transform_6, window_bounds = array<i64: 1, 32>}, {transform_indices = @transform_7, window_bounds = array<i64: 8, 32>}, {transform_indices = @transform_8, window_bounds = array<i64: 8, 8>}]} {
    %c0 = arith.constant 0 : index
    %c0_0 = arith.constant 0 : index
    %c0_1 = arith.constant 0 : index
    %0 = vector.load %arg1[%c0, %c0_0, %c0_1] : memref<8x8x32xf32, #tpu.memory_space<vmem>>, vector<8x8x32xf32>
    %1 = vector.shape_cast %0 : vector<8x8x32xf32> to vector<64x32xf32>
    %c0_2 = arith.constant 0 : index
    %c0_3 = arith.constant 0 : index
    %2 = vector.load %arg2[%c0_2, %c0_3] : memref<8x32xf32, #tpu.memory_space<vmem>>, vector<8x32xf32>
    %c0_4 = arith.constant 0 : index
    %c0_5 = arith.constant 0 : index
    %3 = vector.load %arg3[%c0_4, %c0_5] : memref<32x32xf32, #tpu.memory_space<vmem>>, vector<32x32xf32>
    %c0_6 = arith.constant 0 : index
    %c0_7 = arith.constant 0 : index
    %4 = vector.load %arg4[%c0_6, %c0_7] : memref<1x32xf32, #tpu.memory_space<vmem>>, vector<1x32xf32>
    %c0_8 = arith.constant 0 : index
    %c0_9 = arith.constant 0 : index
    %5 = vector.load %arg5[%c0_8, %c0_9] : memref<32x32xf32, #tpu.memory_space<vmem>>, vector<32x32xf32>
    %c0_10 = arith.constant 0 : index
    %c0_11 = arith.constant 0 : index
    %6 = vector.load %arg6[%c0_10, %c0_11] : memref<1x32xf32, #tpu.memory_space<vmem>>, vector<1x32xf32>
    %c0_12 = arith.constant 0 : index
    %c0_13 = arith.constant 0 : index
    %7 = vector.load %arg7[%c0_12, %c0_13] : memref<1x32xf32, #tpu.memory_space<vmem>>, vector<1x32xf32>
    %cst = arith.constant dense<0.000000e+00> : vector<64x32xf32>
    %8 = tpu.matmul %1, %3, %cst {dimension_numbers = #tpu.dot_dimension_numbers<[1], [0], [0], [1], [0, 0, 1, 1], [], []>} : vector<64x32xf32>, vector<32x32xf32>, vector<64x32xf32> -> vector<64x32xf32>
    %9 = vector.broadcast %4 : vector<1x32xf32> to vector<64x32xf32>
    %10 = arith.addf %8, %9 : vector<64x32xf32>
    %11 = math.tanh %10 : vector<64x32xf32>
    %cst_14 = arith.constant dense<0.000000e+00> : vector<8x32xf32>
    %12 = tpu.matmul %2, %5, %cst_14 {dimension_numbers = #tpu.dot_dimension_numbers<[1], [0], [0], [1], [0, 0, 1, 1], [], []>} : vector<8x32xf32>, vector<32x32xf32>, vector<8x32xf32> -> vector<8x32xf32>
    %13 = vector.broadcast %6 : vector<1x32xf32> to vector<8x32xf32>
    %14 = arith.addf %12, %13 : vector<8x32xf32>
    %15 = math.tanh %14 : vector<8x32xf32>
    %16 = vector.shape_cast %11 : vector<64x32xf32> to vector<8x8x32xf32>
    %17 = vector.broadcast %7 : vector<1x32xf32> to vector<8x32xf32>
    %18 = arith.mulf %15, %17 : vector<8x32xf32>
    %19 = vector.shape_cast %18 : vector<8x32xf32> to vector<8x1x32xf32>
    %20 = vector.broadcast %19 : vector<8x1x32xf32> to vector<8x8x32xf32>
    %21 = arith.mulf %16, %20 : vector<8x8x32xf32>
    %cst_15 = arith.constant dense<0.000000e+00> : vector<8x8xf32>
    %22 = vector.multi_reduction <add>, %21, %cst_15 [2] : vector<8x8x32xf32> to vector<8x8xf32>
    %23 = vector.shape_cast %22 : vector<8x8xf32> to vector<8x8x1xf32>
    %cst_16 = arith.constant dense<0xFF800000> : vector<8x1xf32>
    %24 = vector.multi_reduction <maximumf>, %23, %cst_16 [1] : vector<8x8x1xf32> to vector<8x1xf32>
    %25 = vector.shape_cast %24 : vector<8x1xf32> to vector<8x1x1xf32>
    %26 = vector.broadcast %25 : vector<8x1x1xf32> to vector<8x8x1xf32>
    %27 = arith.subf %23, %26 : vector<8x8x1xf32>
    %28 = math.exp %27 : vector<8x8x1xf32>
    %cst_17 = arith.constant dense<0.000000e+00> : vector<8x1xf32>
    %29 = vector.multi_reduction <add>, %28, %cst_17 [1] : vector<8x8x1xf32> to vector<8x1xf32>
    %30 = vector.shape_cast %29 : vector<8x1xf32> to vector<8x1x1xf32>
    %31 = vector.broadcast %30 : vector<8x1x1xf32> to vector<8x8x1xf32>
    %32 = arith.divf %28, %31 : vector<8x8x1xf32>
    %33 = vector.broadcast %28 : vector<8x8x1xf32> to vector<8x8x32xf32>
    %34 = arith.mulf %33, %0 : vector<8x8x32xf32>
    %cst_18 = arith.constant dense<0.000000e+00> : vector<8x32xf32>
    %35 = vector.multi_reduction <add>, %34, %cst_18 [1] : vector<8x8x32xf32> to vector<8x32xf32>
    %36 = arith.mulf %35, %35 : vector<8x32xf32>
    %cst_19 = arith.constant dense<0.000000e+00> : vector<8xf32>
    %37 = vector.multi_reduction <add>, %36, %cst_19 [1] : vector<8x32xf32> to vector<8xf32>
    %38 = vector.shape_cast %37 : vector<8xf32> to vector<8x1xf32>
    %39 = math.rsqrt %38 : vector<8x1xf32>
    %40 = vector.broadcast %39 : vector<8x1xf32> to vector<8x32xf32>
    %41 = arith.mulf %35, %40 : vector<8x32xf32>
    %c0_20 = arith.constant 0 : index
    %c0_21 = arith.constant 0 : index
    %42 = vector.load %arg8[%c0_20, %c0_21] : memref<8x32xf32, #tpu.memory_space<vmem>>, vector<8x32xf32>
    tpu.vector_store %arg8[%c0_20, %c0_21], %41 {strides = array<i32>} : memref<8x32xf32, #tpu.memory_space<vmem>>, vector<8x32xf32>,
    %43 = vector.shape_cast %32 : vector<8x8x1xf32> to vector<8x8xf32>
    %c0_22 = arith.constant 0 : index
    %c0_23 = arith.constant 0 : index
    %44 = vector.load %arg9[%c0_22, %c0_23] : memref<8x8xf32, #tpu.memory_space<vmem>>, vector<8x8xf32>
    tpu.vector_store %arg9[%c0_22, %c0_23], %43 {strides = array<i32>} : memref<8x8xf32, #tpu.memory_space<vmem>>, vector<8x8xf32>,
    return
  }
  func.func @transform_0(%arg0: i32) -> (i32, i32, i32) {
    %c0_i32 = arith.constant 0 : i32
    %c0_i32_0 = arith.constant 0 : i32
    %c0_i32_1 = arith.constant 0 : i32
    return %arg0, %c0_i32, %c0_i32_0 : i32, i32, i32
  }
  func.func @transform_1(%arg0: i32) -> (i32, i32) {
    %c0_i32 = arith.constant 0 : i32
    %c0_i32_0 = arith.constant 0 : i32
    return %arg0, %c0_i32 : i32, i32
  }
  func.func @transform_2(%arg0: i32) -> (i32, i32) {
    %c0_i32 = arith.constant 0 : i32
    %c0_i32_0 = arith.constant 0 : i32
    %c0_i32_1 = arith.constant 0 : i32
    return %c0_i32, %c0_i32_0 : i32, i32
  }
  func.func @transform_3(%arg0: i32) -> (i32, i32) {
    %c0_i32 = arith.constant 0 : i32
    %c0_i32_0 = arith.constant 0 : i32
    %c0_i32_1 = arith.constant 0 : i32
    return %c0_i32, %c0_i32_0 : i32, i32
  }
  func.func @transform_4(%arg0: i32) -> (i32, i32) {
    %c0_i32 = arith.constant 0 : i32
    %c0_i32_0 = arith.constant 0 : i32
    %c0_i32_1 = arith.constant 0 : i32
    return %c0_i32, %c0_i32_0 : i32, i32
  }
  func.func @transform_5(%arg0: i32) -> (i32, i32) {
    %c0_i32 = arith.constant 0 : i32
    %c0_i32_0 = arith.constant 0 : i32
    %c0_i32_1 = arith.constant 0 : i32
    return %c0_i32, %c0_i32_0 : i32, i32
  }
  func.func @transform_6(%arg0: i32) -> (i32, i32) {
    %c0_i32 = arith.constant 0 : i32
    %c0_i32_0 = arith.constant 0 : i32
    %c0_i32_1 = arith.constant 0 : i32
    return %c0_i32, %c0_i32_0 : i32, i32
  }
  func.func @transform_7(%arg0: i32) -> (i32, i32) {
    %c0_i32 = arith.constant 0 : i32
    %c0_i32_0 = arith.constant 0 : i32
    return %arg0, %c0_i32 : i32, i32
  }
  func.func @transform_8(%arg0: i32) -> (i32, i32) {
    %c0_i32 = arith.constant 0 : i32
    %c0_i32_0 = arith.constant 0 : i32
    return %arg0, %c0_i32 : i32, i32
  }
}

</mosaic_0001>

<llo_original>
// kernel: tpu_custom_call.1
$region0: #{tpu_custom_call.1}
  #allocation0 [shape = 'u32[]', space=smem, size = 0x4, offset = 0x4, fixed_abs, tag = 'smem constant byte address 0x4 - core index']
  #allocation1 [shape = 'u32[144,128]{1,0:T(1,128)}', space=vmem, size = 0x12000, scoped, tag = 'internal scratch']
  %s0 = inlined_call_operand.hbm [shape: f32[8,8,32], index: 0, kind: input, shape index: {}]
  %s1 = inlined_call_operand.hbm [shape: f32[8,32], index: 1, kind: input, shape index: {}]
  %s2 = inlined_call_operand.hbm [shape: f32[32,32], index: 2, kind: input, shape index: {}]
  %s3 = inlined_call_operand.vmem [shape: f32[1,32], index: 3, kind: input, shape index: {}]
  %s4 = inlined_call_operand.hbm [shape: f32[32,32], index: 4, kind: input, shape index: {}]
  %s5 = inlined_call_operand.vmem [shape: f32[1,32], index: 5, kind: input, shape index: {}]
  %s6 = inlined_call_operand.vmem [shape: f32[1,32], index: 6, kind: input, shape index: {}]
  %s7 = inlined_call_operand.hbm [shape: f32[8,32], index: 7, kind: output, shape index: {0}]
  %s8 = inlined_call_operand.hbm [shape: f32[8,8], index: 8, kind: output, shape index: {1}]
  %9 = xla_tuple %s7, %s8
  %s10 = sld [smem:[#allocation0]]
  $region62: #{tpu_custom_call.1} parent=0
    _
  %s12 = ssub.s32 1, %s10
  %s13 = scalar_select 0, %s12, %s10
  $region1: #{tpu_custom_call.1} parent=0
    #allocation2 [shape = 'u8[32768]{0}', space=vmem, size = 0x8000, scoped, tag = 'input window, operand 0, single buffered']
    #allocation3 [shape = 's32[1]{0}', space=sflag, size = 0x4, scoped, tag = 'scoped memory for tpu_custom_call.1']
    #allocation4 [shape = 's32[1]{0}', space=sflag, size = 0x4, scoped, tag = 'scoped memory for tpu_custom_call.1']
    #allocation5 [shape = 'u8[4096]{0}', space=vmem, size = 0x1000, scoped, tag = 'input window, operand 1, single buffered']
    #allocation6 [shape = 's32[1]{0}', space=sflag, size = 0x4, scoped, tag = 'scoped memory for tpu_custom_call.1']
    #allocation7 [shape = 'u8[16384]{0}', space=vmem, size = 0x4000, scoped, tag = 'input window, operand 2, single buffered']
    #allocation8 [shape = 'u8[16384]{0}', space=vmem, size = 0x4000, scoped, tag = 'input window, operand 4, single buffered']
    #allocation9 [shape = 's32[1]{0}', space=sflag, size = 0x4, scoped, tag = 'scoped memory for tpu_custom_call.1']
    #allocation10 [shape = 'u8[4096]{0}', space=vmem, size = 0x1000, scoped, tag = 'output window, operand 0, single buffered']
    #allocation11 [shape = 'u8[4096]{0}', space=vmem, size = 0x1000, scoped, tag = 'output window, operand 1, single buffered']
    #allocation12 [shape = 's32[1]{0}', space=sflag, size = 0x4, scoped, tag = 'scoped memory for tpu_custom_call.1']
    %14 = vsyncpa [#allocation3], 0
    %15 = vsyncpa [#allocation6], 0
    %16 = vsyncpa [#allocation9], 0
    %17 = vsyncpa [#allocation4], 0
    %18 = vsyncpa [#allocation12], 0
    // Predicated region
    $region2: #{tpu_custom_call.1} parent=1 // pred_check
      _
    $region3: #{tpu_custom_call.1} parent=1 // pred_check_branch
      %20 = sbr.rel (0) target = $region5
    $region4: #{tpu_custom_call.1} parent=1 // pred_region
      %s22 = ssub.s32 1024, 1024
      %23 = vsyncadd [#allocation3], %s22
      %s24 = sshll.u32 [#allocation2], 4
      %s25 = int_to_ptr.vmem [resolvable:$true] %s24
      %30 = dma.hbm_to_vmem [thread:$0]  %s0, 1024, %s25, [#allocation3], 128, 128, 8
    $region5: #{tpu_custom_call.1} parent=1 // pred_fallthru
      _
    // Predicated region
    $region6: #{tpu_custom_call.1} parent=1 // pred_check
      _
    $region7: #{tpu_custom_call.1} parent=1 // pred_check_branch
      %32 = sbr.rel (0) target = $region9
    $region8: #{tpu_custom_call.1} parent=1 // pred_region
      %s34 = ssub.s32 128, 128
      %35 = vsyncadd [#allocation6], %s34
      %s37 = sshll.u32 [#allocation5], 4
      %s38 = int_to_ptr.vmem [resolvable:$true] %s37
      %40 = dma.hbm_to_vmem [thread:$0]  %s1, 128, %s38, [#allocation6]
    $region9: #{tpu_custom_call.1} parent=1 // pred_fallthru
      _
    // Predicated region
    $region10: #{tpu_custom_call.1} parent=1 // pred_check
      _
    $region11: #{tpu_custom_call.1} parent=1 // pred_check_branch
      %42 = sbr.rel (0) target = $region13
    $region12: #{tpu_custom_call.1} parent=1 // pred_region
      %s44 = ssub.s32 512, 512
      %45 = vsyncadd [#allocation6], %s44
      %s46 = sshll.u32 [#allocation7], 4
      %s47 = int_to_ptr.vmem [resolvable:$true] %s46
      %52 = dma.hbm_to_vmem [thread:$0]  %s2, 512, %s47, [#allocation6], 128, 128, 8
    $region13: #{tpu_custom_call.1} parent=1 // pred_fallthru
      _
    // Predicated region
    $region14: #{tpu_custom_call.1} parent=1 // pred_check
      _
    $region15: #{tpu_custom_call.1} parent=1 // pred_check_branch
      %54 = sbr.rel (0) target = $region17
    $region16: #{tpu_custom_call.1} parent=1 // pred_region
      _
    $region17: #{tpu_custom_call.1} parent=1 // pred_fallthru
      _
    // Predicated region
    $region18: #{tpu_custom_call.1} parent=1 // pred_check
      _
    $region19: #{tpu_custom_call.1} parent=1 // pred_check_branch
      %56 = sbr.rel (0) target = $region21
    $region20: #{tpu_custom_call.1} parent=1 // pred_region
      %s58 = ssub.s32 512, 512
      %59 = vsyncadd [#allocation9], %s58
      %s60 = sshll.u32 [#allocation8], 4
      %s61 = int_to_ptr.vmem [resolvable:$true] %s60
      %66 = dma.hbm_to_vmem [thread:$0]  %s4, 512, %s61, [#allocation9], 128, 128, 8
    $region21: #{tpu_custom_call.1} parent=1 // pred_fallthru
      _
    // Predicated region
    $region22: #{tpu_custom_call.1} parent=1 // pred_check
      _
    $region23: #{tpu_custom_call.1} parent=1 // pred_check_branch
      %68 = sbr.rel (0) target = $region25
    $region24: #{tpu_custom_call.1} parent=1 // pred_region
      _
    $region25: #{tpu_custom_call.1} parent=1 // pred_fallthru
      _
    // Predicated region
    $region26: #{tpu_custom_call.1} parent=1 // pred_check
      _
    $region27: #{tpu_custom_call.1} parent=1 // pred_check_branch
      %70 = sbr.rel (0) target = $region29
    $region28: #{tpu_custom_call.1} parent=1 // pred_region
      _
    $region29: #{tpu_custom_call.1} parent=1 // pred_fallthru
      _
    // Predicated region
    $region30: #{tpu_custom_call.1} parent=1 // pred_check
      _
    $region31: #{tpu_custom_call.1} parent=1 // pred_check_branch
      %72 = sbr.rel (0) target = $region33
    $region32: #{tpu_custom_call.1} parent=1 // pred_region
      %73 = dma.done [#allocation3], 1024
    $region33: #{tpu_custom_call.1} parent=1 // pred_fallthru
      _
    // Predicated region
    $region34: #{tpu_custom_call.1} parent=1 // pred_check
      _
    $region35: #{tpu_custom_call.1} parent=1 // pred_check_branch
      %75 = sbr.rel (0) target = $region37
    $region36: #{tpu_custom_call.1} parent=1 // pred_region
      %76 = dma.done [#allocation6], 128
    $region37: #{tpu_custom_call.1} parent=1 // pred_fallthru
      _
    // Predicated region
    $region38: #{tpu_custom_call.1} parent=1 // pred_check
      _
    $region39: #{tpu_custom_call.1} parent=1 // pred_check_branch
      %78 = sbr.rel (0) target = $region41
    $region40: #{tpu_custom_call.1} parent=1 // pred_region
      %79 = dma.done [#allocation6], 512
    $region41: #{tpu_custom_call.1} parent=1 // pred_fallthru
      _
    // Predicated region
    $region42: #{tpu_custom_call.1} parent=1 // pred_check
      _
    $region43: #{tpu_custom_call.1} parent=1 // pred_check_branch
      %81 = sbr.rel (0) target = $region45
    $region44: #{tpu_custom_call.1} parent=1 // pred_region
      %82 = dma.done [#allocation9], 512
    $region45: #{tpu_custom_call.1} parent=1 // pred_fallthru
      _
    %v83 = vld [vmem:[#allocation2] sm:$0xff]
    %v84 = vld [vmem:[#allocation2 + $0x8] sm:$0xff]
    %v85 = vld [vmem:[#allocation2 + $0x10] sm:$0xff]
    %v86 = vld [vmem:[#allocation2 + $0x18] sm:$0xff]
    %v87 = vld [vmem:[#allocation2 + $0x20] sm:$0xff]
    %v88 = vld [vmem:[#allocation2 + $0x28] sm:$0xff]
    %v89 = vld [vmem:[#allocation2 + $0x30] sm:$0xff]
    %v90 = vld [vmem:[#allocation2 + $0x38] sm:$0xff]
    %v91 = vld [vmem:[#allocation5] sm:$0xff]
    %v92 = vld [vmem:[#allocation7] sm:$0xff]
    %v93 = vld [vmem:[#allocation7 + $0x8] sm:$0xff]
    %v94 = vld [vmem:[#allocation7 + $0x10] sm:$0xff]
    %v95 = vld [vmem:[#allocation7 + $0x18] sm:$0xff]
    %v96 = vld [vmem:[%s3] sm:$0x1]
    %v97 = vld [vmem:[#allocation8] sm:$0xff]
    %v98 = vld [vmem:[#allocation8 + $0x8] sm:$0xff]
    %v99 = vld [vmem:[#allocation8 + $0x10] sm:$0xff]
    %v100 = vld [vmem:[#allocation8 + $0x18] sm:$0xff]
    %v101 = vld [vmem:[%s5] sm:$0x1]
    %v102 = vld [vmem:[%s6] sm:$0x1]
    %v104 = vlaneseq
    %v105 = vshrl.u32 %v104, 7
    %v106 = vsub.s32 0, %v105
    %v107 = vrot.slane %v96, %v106
    %vm109 = vcmask 261120
    %v111 = vsel %vm109, %v83, 0
    %v114 = vsel %vm109, %v84, 0
    %v117 = vsel %vm109, %v85, 0
    %v120 = vsel %vm109, %v86, 0
    %v123 = vsel %vm109, %v87, 0
    %v126 = vsel %vm109, %v88, 0
    %v129 = vsel %vm109, %v89, 0
    %v132 = vsel %vm109, %v90, 0
    %134 = vmatprep.subr.mxu0 0.0
    %135 = vmatpush1.msra.mxu0 %v92
    %136 = vmatprep.subr.mxu0 0.0
    %137 = vmatpush1.msra.mxu0 %v93
    %138 = vmatprep.subr.mxu0 0.0
    %139 = vmatpush1.msra.mxu0 %v94
    %140 = vmatprep.subr.mxu0 0.0
    %141 = vmatpush1.msra.mxu0 %v95
    %142 = vmatprep.subr.mxu0 0.0
    %143 = vmatpush1.msra.mxu0 0.0
    %144 = vmatprep.subr.mxu0 0.0
    %145 = vmatpush1.msra.mxu0 0.0
    %146 = vmatprep.subr.mxu0 0.0
    %147 = vmatpush1.msra.mxu0 0.0
    %148 = vmatprep.subr.mxu0 0.0
    %149 = vmatpush1.msra.mxu0 0.0
    %150 = vmatprep.subr.mxu0 0.0
    %151 = vmatpush1.msra.mxu0 0.0
    %152 = vmatprep.subr.mxu0 0.0
    %153 = vmatpush1.msra.mxu0 0.0
    %154 = vmatprep.subr.mxu0 0.0
    %155 = vmatpush1.msra.mxu0 0.0
    %156 = vmatprep.subr.mxu0 0.0
    %157 = vmatpush1.msra.mxu0 0.0
    %158 = vmatprep.subr.mxu0 0.0
    %159 = vmatpush1.msra.mxu0 0.0
    %160 = vmatprep.subr.mxu0 0.0
    %161 = vmatpush1.msra.mxu0 0.0
    %162 = vmatprep.subr.mxu0 0.0
    %163 = vmatpush1.msra.mxu0 0.0
    %164 = vmatprep.subr.mxu0 0.0
    %165 = vmatpush1.msra.mxu0 0.0
    %166 = vmatprep.subr.mxu0 0.0
    %167 = vmatpush1.msra.mxu0 0.0
    %168 = vmatprep.subr.mxu0 0.0
    %169 = vmatpush1.msra.mxu0 0.0
    %170 = vmatprep.subr.mxu0 0.0
    %171 = vmatpush1.msra.mxu0 0.0
    %172 = vmatprep.subr.mxu0 0.0
    %173 = vmatpush1.msra.mxu0 0.0
    %174 = vmatprep.subr.mxu0 0.0
    %175 = vmatpush1.msra.mxu0 0.0
    %176 = vmatprep.subr.mxu0 0.0
    %177 = vmatpush1.msra.mxu0 0.0
    %178 = vmatprep.subr.mxu0 0.0
    %179 = vmatpush1.msra.mxu0 0.0
    %180 = vmatprep.subr.mxu0 0.0
    %181 = vmatpush1.msra.mxu0 0.0
    %182 = vmatprep.subr.mxu0 0.0
    %183 = vmatpush1.msra.mxu0 0.0
    %184 = vmatprep.subr.mxu0 0.0
    %185 = vmatpush1.msra.mxu0 0.0
    %186 = vmatprep.subr.mxu0 0.0
    %187 = vmatpush1.msra.mxu0 0.0
    %188 = vmatprep.subr.mxu0 0.0
    %189 = vmatpush1.msra.mxu0 0.0
    %190 = vmatprep.subr.mxu0 0.0
    %191 = vmatpush1.msra.mxu0 0.0
    %192 = vmatprep.subr.mxu0 0.0
    %193 = vmatpush1.msra.mxu0 0.0
    %194 = vmatprep.subr.mxu0 0.0
    %195 = vmatpush1.msra.mxu0 0.0
    %196 = vmatprep.subr.mxu0 0.0
    %197 = vmatpush1.msra.mxu0 0.0
    %198 = vmatprep.mubr.f32.mxu0 0.0
    %199 = vmatmul.mubr.f32.gmra.mrb[0].mxu0 %v111
    %v200 = vpop.f32.mrb[0].mxu0
    %v201 = vadd.f32 %v107, %v200
    %v202 = vpop.f32.mrb[0].mxu0
    %203 = vmatprep.mubr.f32.mxu0 0.0
    %204 = vmatmul.mubr.f32.gmra.mrb[0].mxu0 %v114
    %v205 = vpop.f32.mrb[0].mxu0
    %v206 = vadd.f32 %v107, %v205
    %v207 = vpop.f32.mrb[0].mxu0
    %208 = vmatprep.mubr.f32.mxu0 0.0
    %209 = vmatmul.mubr.f32.gmra.mrb[0].mxu0 %v117
    %v210 = vpop.f32.mrb[0].mxu0
    %v211 = vadd.f32 %v107, %v210
    %v212 = vpop.f32.mrb[0].mxu0
    %213 = vmatprep.mubr.f32.mxu0 0.0
    %214 = vmatmul.mubr.f32.gmra.mrb[0].mxu0 %v120
    %v215 = vpop.f32.mrb[0].mxu0
    %v216 = vadd.f32 %v107, %v215
    %v217 = vpop.f32.mrb[0].mxu0
    %218 = vmatprep.mubr.f32.mxu0 0.0
    %219 = vmatmul.mubr.f32.gmra.mrb[0].mxu0 %v123
    %v220 = vpop.f32.mrb[0].mxu0
    %v221 = vadd.f32 %v107, %v220
    %v222 = vpop.f32.mrb[0].mxu0
    %223 = vmatprep.mubr.f32.mxu0 0.0
    %224 = vmatmul.mubr.f32.gmra.mrb[0].mxu0 %v126
    %v225 = vpop.f32.mrb[0].mxu0
    %v226 = vadd.f32 %v107, %v225
    %v227 = vpop.f32.mrb[0].mxu0
    %228 = vmatprep.mubr.f32.mxu0 0.0
    %229 = vmatmul.mubr.f32.gmra.mrb[0].mxu0 %v129
    %v230 = vpop.f32.mrb[0].mxu0
    %v231 = vadd.f32 %v107, %v230
    %v232 = vpop.f32.mrb[0].mxu0
    %233 = vmatprep.mubr.f32.mxu0 0.0
    %234 = vmatmul.mubr.f32.gmra.mrb[0].mxu0 %v132
    %v235 = vpop.f32.mrb[0].mxu0
    %v236 = vadd.f32 %v107, %v235
    %v237 = vpop.f32.mrb[0].mxu0
    %238 = vdwg.mxu0
    %v239 = vtanh.pop %v201
    %v240 = vtanh.pop %v206
    %v241 = vtanh.pop %v211
    %v242 = vtanh.pop %v216
    %v243 = vtanh.pop %v221
    %v244 = vtanh.pop %v226
    %v245 = vtanh.pop %v231
    %v246 = vtanh.pop %v236
    %v248 = vlaneseq
    %v249 = vshrl.u32 %v248, 7
    %v250 = vsub.s32 0, %v249
    %v251 = vrot.slane %v101, %v250
    %v254 = vsel %vm109, %v91, 0
    %256 = vmatprep.subr.mxu0 0.0
    %257 = vmatpush1.msra.mxu0 %v97
    %258 = vmatprep.subr.mxu0 0.0
    %259 = vmatpush1.msra.mxu0 %v98
    %260 = vmatprep.subr.mxu0 0.0
    %261 = vmatpush1.msra.mxu0 %v99
    %262 = vmatprep.subr.mxu0 0.0
    %263 = vmatpush1.msra.mxu0 %v100
    %264 = vmatprep.subr.mxu0 0.0
    %265 = vmatpush1.msra.mxu0 0.0
    %266 = vmatprep.subr.mxu0 0.0
    %267 = vmatpush1.msra.mxu0 0.0
    %268 = vmatprep.subr.mxu0 0.0
    %269 = vmatpush1.msra.mxu0 0.0
    %270 = vmatprep.subr.mxu0 0.0
    %271 = vmatpush1.msra.mxu0 0.0
    %272 = vmatprep.subr.mxu0 0.0
    %273 = vmatpush1.msra.mxu0 0.0
    %274 = vmatprep.subr.mxu0 0.0
    %275 = vmatpush1.msra.mxu0 0.0
    %276 = vmatprep.subr.mxu0 0.0
    %277 = vmatpush1.msra.mxu0 0.0
    %278 = vmatprep.subr.mxu0 0.0
    %279 = vmatpush1.msra.mxu0 0.0
    %280 = vmatprep.subr.mxu0 0.0
    %281 = vmatpush1.msra.mxu0 0.0
    %282 = vmatprep.subr.mxu0 0.0
    %283 = vmatpush1.msra.mxu0 0.0
    %284 = vmatprep.subr.mxu0 0.0
    %285 = vmatpush1.msra.mxu0 0.0
    %286 = vmatprep.subr.mxu0 0.0
    %287 = vmatpush1.msra.mxu0 0.0
    %288 = vmatprep.subr.mxu0 0.0
    %289 = vmatpush1.msra.mxu0 0.0
    %290 = vmatprep.subr.mxu0 0.0
    %291 = vmatpush1.msra.mxu0 0.0
    %292 = vmatprep.subr.mxu0 0.0
    %293 = vmatpush1.msra.mxu0 0.0
    %294 = vmatprep.subr.mxu0 0.0
    %295 = vmatpush1.msra.mxu0 0.0
    %296 = vmatprep.subr.mxu0 0.0
    %297 = vmatpush1.msra.mxu0 0.0
    %298 = vmatprep.subr.mxu0 0.0
    %299 = vmatpush1.msra.mxu0 0.0
    %300 = vmatprep.subr.mxu0 0.0
    %301 = vmatpush1.msra.mxu0 0.0
    %302 = vmatprep.subr.mxu0 0.0
    %303 = vmatpush1.msra.mxu0 0.0
    %304 = vmatprep.subr.mxu0 0.0
    %305 = vmatpush1.msra.mxu0 0.0
    %306 = vmatprep.subr.mxu0 0.0
    %307 = vmatpush1.msra.mxu0 0.0
    %308 = vmatprep.subr.mxu0 0.0
    %309 = vmatpush1.msra.mxu0 0.0
    %310 = vmatprep.subr.mxu0 0.0
    %311 = vmatpush1.msra.mxu0 0.0
    %312 = vmatprep.subr.mxu0 0.0
    %313 = vmatpush1.msra.mxu0 0.0
    %314 = vmatprep.subr.mxu0 0.0
    %315 = vmatpush1.msra.mxu0 0.0
    %316 = vmatprep.subr.mxu0 0.0
    %317 = vmatpush1.msra.mxu0 0.0
    %318 = vmatprep.subr.mxu0 0.0
    %319 = vmatpush1.msra.mxu0 0.0
    %320 = vmatprep.mubr.f32.mxu0 0.0
    %321 = vmatmul.mubr.f32.gmra.mrb[0].mxu0 %v254
    %v322 = vpop.f32.mrb[0].mxu0
    %v323 = vadd.f32 %v251, %v322
    %v324 = vpop.f32.mrb[0].mxu0
    %325 = vdwg.mxu0
    %v326 = vtanh.pop %v323
    %v328 = vlaneseq
    %v329 = vshrl.u32 %v328, 7
    %v330 = vsub.s32 0, %v329
    %v331 = vrot.slane %v102, %v330
    %v333 = vmul.f32 %v326, %v331
    %v335 = vcombine.high %v333, %v333
    %v337 = vunpack.c.l.s4 1966171168
    %v338 = vunpack.c.0.s8 %v337
    %v339 = vlaneseq
    %v340 = vshrl.u32 %v339, 7
    %v341 = vsub.s32 %v338, %v340
    %v342 = vrot.slane %v333, %v341
    %v344 = vunpack.c.l.s4 1966171168
    %v345 = vunpack.c.0.s8 %v344
    %v346 = vlaneseq
    %v347 = vshrl.u32 %v346, 7
    %v348 = vsub.s32 %v345, %v347
    %v349 = vrot.slane %v335, %v348
    %v350 = vcombine.high %v342, %v342
    %v351 = vcombine.high %v349, %v349
    %v353 = vunpack.c.l.s4 1966171168
    %v354 = vunpack.c.0.s8 %v353
    %v355 = vlaneseq
    %v356 = vshrl.u32 %v355, 7
    %v357 = vsub.s32 %v354, %v356
    %v358 = vrot.slane %v342, %v357
    %v360 = vunpack.c.l.s4 1966171168
    %v361 = vunpack.c.0.s8 %v360
    %v362 = vlaneseq
    %v363 = vshrl.u32 %v362, 7
    %v364 = vsub.s32 %v361, %v363
    %v365 = vrot.slane %v349, %v364
    %v367 = vunpack.c.l.s4 1966171168
    %v368 = vunpack.c.0.s8 %v367
    %v369 = vlaneseq
    %v370 = vshrl.u32 %v369, 7
    %v371 = vsub.s32 %v368, %v370
    %v372 = vrot.slane %v350, %v371
    %v374 = vunpack.c.l.s4 1966171168
    %v375 = vunpack.c.0.s8 %v374
    %v376 = vlaneseq
    %v377 = vshrl.u32 %v376, 7
    %v378 = vsub.s32 %v375, %v377
    %v379 = vrot.slane %v351, %v378
    %v380 = vcombine.high %v358, %v358
    %v381 = vcombine.high %v365, %v365
    %v382 = vcombine.high %v372, %v372
    %v383 = vcombine.high %v379, %v379
    %v384 = vlaneseq
    %v385 = vshrl.u32 %v384, 7
    %v386 = vsub.s32 0, %v385
    %v387 = vrot.slane %v358, %v386
    %v388 = vlaneseq
    %v389 = vshrl.u32 %v388, 7
    %v390 = vsub.s32 0, %v389
    %v391 = vrot.slane %v372, %v390
    %v392 = vlaneseq
    %v393 = vshrl.u32 %v392, 7
    %v394 = vsub.s32 0, %v393
    %v395 = vrot.slane %v380, %v394
    %v396 = vlaneseq
    %v397 = vshrl.u32 %v396, 7
    %v398 = vsub.s32 0, %v397
    %v399 = vrot.slane %v382, %v398
    %v400 = vlaneseq
    %v401 = vshrl.u32 %v400, 7
    %v402 = vsub.s32 0, %v401
    %v403 = vrot.slane %v365, %v402
    %v404 = vlaneseq
    %v405 = vshrl.u32 %v404, 7
    %v406 = vsub.s32 0, %v405
    %v407 = vrot.slane %v379, %v406
    %v408 = vlaneseq
    %v409 = vshrl.u32 %v408, 7
    %v410 = vsub.s32 0, %v409
    %v411 = vrot.slane %v381, %v410
    %v412 = vlaneseq
    %v413 = vshrl.u32 %v412, 7
    %v414 = vsub.s32 0, %v413
    %v415 = vrot.slane %v383, %v414
    %v424 = vmul.f32 %v239, %v387
    %v425 = vmul.f32 %v240, %v391
    %v426 = vmul.f32 %v241, %v395
    %v427 = vmul.f32 %v242, %v399
    %v428 = vmul.f32 %v243, %v403
    %v429 = vmul.f32 %v244, %v407
    %v430 = vmul.f32 %v245, %v411
    %v431 = vmul.f32 %v246, %v415
    %v432 = vsel %vm109, %v424, 0.0
    %433 = vadd.xlane.f32.xlu0 %v432
    %v434 = vpop.xlane.xlu0 %433
    %v435 = vsel %vm109, %v425, 0.0
    %436 = vadd.xlane.f32.xlu0 %v435
    %v437 = vpop.xlane.xlu0 %436
    %v438 = vsel %vm109, %v426, 0.0
    %439 = vadd.xlane.f32.xlu0 %v438
    %v440 = vpop.xlane.xlu0 %439
    %v441 = vsel %vm109, %v427, 0.0
    %442 = vadd.xlane.f32.xlu0 %v441
    %v443 = vpop.xlane.xlu0 %442
    %v444 = vsel %vm109, %v428, 0.0
    %445 = vadd.xlane.f32.xlu0 %v444
    %v446 = vpop.xlane.xlu0 %445
    %v447 = vsel %vm109, %v429, 0.0
    %448 = vadd.xlane.f32.xlu0 %v447
    %v449 = vpop.xlane.xlu0 %448
    %v450 = vsel %vm109, %v430, 0.0
    %451 = vadd.xlane.f32.xlu0 %v450
    %v452 = vpop.xlane.xlu0 %451
    %v453 = vsel %vm109, %v431, 0.0
    %454 = vadd.xlane.f32.xlu0 %v453
    %v455 = vpop.xlane.xlu0 %454
    %v456 = vrot.slane %v434, 4
    %v457 = vmax.f32 %v434, %v456
    %v458 = vrot.slane %v457, 2
    %v459 = vmax.f32 %v457, %v458
    %v460 = vrot.slane %v459, 1
    %v461 = vmax.f32 %v459, %v460
    %v462 = vrot.slane %v437, 4
    %v463 = vmax.f32 %v437, %v462
    %v464 = vrot.slane %v463, 2
    %v465 = vmax.f32 %v463, %v464
    %v466 = vrot.slane %v465, 1
    %v467 = vmax.f32 %v465, %v466
    %v468 = vrot.slane %v440, 4
    %v469 = vmax.f32 %v440, %v468
    %v470 = vrot.slane %v469, 2
    %v471 = vmax.f32 %v469, %v470
    %v472 = vrot.slane %v471, 1
    %v473 = vmax.f32 %v471, %v472
    %v474 = vrot.slane %v443, 4
    %v475 = vmax.f32 %v443, %v474
    %v476 = vrot.slane %v475, 2
    %v477 = vmax.f32 %v475, %v476
    %v478 = vrot.slane %v477, 1
    %v479 = vmax.f32 %v477, %v478
    %v480 = vrot.slane %v446, 4
    %v481 = vmax.f32 %v446, %v480
    %v482 = vrot.slane %v481, 2
    %v483 = vmax.f32 %v481, %v482
    %v484 = vrot.slane %v483, 1
    %v485 = vmax.f32 %v483, %v484
    %v486 = vrot.slane %v449, 4
    %v487 = vmax.f32 %v449, %v486
    %v488 = vrot.slane %v487, 2
    %v489 = vmax.f32 %v487, %v488
    %v490 = vrot.slane %v489, 1
    %v491 = vmax.f32 %v489, %v490
    %v492 = vrot.slane %v452, 4
    %v493 = vmax.f32 %v452, %v492
    %v494 = vrot.slane %v493, 2
    %v495 = vmax.f32 %v493, %v494
    %v496 = vrot.slane %v495, 1
    %v497 = vmax.f32 %v495, %v496
    %v498 = vrot.slane %v455, 4
    %v499 = vmax.f32 %v455, %v498
    %v500 = vrot.slane %v499, 2
    %v501 = vmax.f32 %v499, %v500
    %v502 = vrot.slane %v501, 1
    %v503 = vmax.f32 %v501, %v502
    %v504 = vsub.f32 %v434, %v461
    %v505 = vsub.f32 %v437, %v467
    %v506 = vsub.f32 %v440, %v473
    %v507 = vsub.f32 %v443, %v479
    %v508 = vsub.f32 %v446, %v485
    %v509 = vsub.f32 %v449, %v491
    %v510 = vsub.f32 %v452, %v497
    %v511 = vsub.f32 %v455, %v503
    %v512 = vmul.f32 %v504, 1.442695
    %v513 = vpow.pop %v512
    %v514 = vmul.f32 %v505, 1.442695
    %v515 = vpow.pop %v514
    %v516 = vmul.f32 %v506, 1.442695
    %v517 = vpow.pop %v516
    %v518 = vmul.f32 %v507, 1.442695
    %v519 = vpow.pop %v518
    %v520 = vmul.f32 %v508, 1.442695
    %v521 = vpow.pop %v520
    %v522 = vmul.f32 %v509, 1.442695
    %v523 = vpow.pop %v522
    %v524 = vmul.f32 %v510, 1.442695
    %v525 = vpow.pop %v524
    %v526 = vmul.f32 %v511, 1.442695
    %v527 = vpow.pop %v526
    %v528 = vrot.slane %v513, 4
    %v529 = vadd.f32 %v513, %v528
    %v530 = vrot.slane %v529, 2
    %v531 = vadd.f32 %v529, %v530
    %v532 = vrot.slane %v531, 1
    %v533 = vadd.f32 %v531, %v532
    %v534 = vrot.slane %v515, 4
    %v535 = vadd.f32 %v515, %v534
    %v536 = vrot.slane %v535, 2
    %v537 = vadd.f32 %v535, %v536
    %v538 = vrot.slane %v537, 1
    %v539 = vadd.f32 %v537, %v538
    %v540 = vrot.slane %v517, 4
    %v541 = vadd.f32 %v517, %v540
    %v542 = vrot.slane %v541, 2
    %v543 = vadd.f32 %v541, %v542
    %v544 = vrot.slane %v543, 1
    %v545 = vadd.f32 %v543, %v544
    %v546 = vrot.slane %v519, 4
    %v547 = vadd.f32 %v519, %v546
    %v548 = vrot.slane %v547, 2
    %v549 = vadd.f32 %v547, %v548
    %v550 = vrot.slane %v549, 1
    %v551 = vadd.f32 %v549, %v550
    %v552 = vrot.slane %v521, 4
    %v553 = vadd.f32 %v521, %v552
    %v554 = vrot.slane %v553, 2
    %v555 = vadd.f32 %v553, %v554
    %v556 = vrot.slane %v555, 1
    %v557 = vadd.f32 %v555, %v556
    %v558 = vrot.slane %v523, 4
    %v559 = vadd.f32 %v523, %v558
    %v560 = vrot.slane %v559, 2
    %v561 = vadd.f32 %v559, %v560
    %v562 = vrot.slane %v561, 1
    %v563 = vadd.f32 %v561, %v562
    %v564 = vrot.slane %v525, 4
    %v565 = vadd.f32 %v525, %v564
    %v566 = vrot.slane %v565, 2
    %v567 = vadd.f32 %v565, %v566
    %v568 = vrot.slane %v567, 1
    %v569 = vadd.f32 %v567, %v568
    %v570 = vrot.slane %v527, 4
    %v571 = vadd.f32 %v527, %v570
    %v572 = vrot.slane %v571, 2
    %v573 = vadd.f32 %v571, %v572
    %v574 = vrot.slane %v573, 1
    %v575 = vadd.f32 %v573, %v574
    %v576 = vrcp.pop %v533
    %v577 = vmul.f32 %v513, %v576
    %v578 = vrcp.pop %v539
    %v579 = vmul.f32 %v515, %v578
    %v580 = vrcp.pop %v545
    %v581 = vmul.f32 %v517, %v580
    %v582 = vrcp.pop %v551
    %v583 = vmul.f32 %v519, %v582
    %v584 = vrcp.pop %v557
    %v585 = vmul.f32 %v521, %v584
    %v586 = vrcp.pop %v563
    %v587 = vmul.f32 %v523, %v586
    %v588 = vrcp.pop %v569
    %v589 = vmul.f32 %v525, %v588
    %v590 = vrcp.pop %v575
    %v591 = vmul.f32 %v527, %v590
    %v592 = vmul.f32 %v513, %v83
    %v593 = vmul.f32 %v515, %v84
    %v594 = vmul.f32 %v517, %v85
    %v595 = vmul.f32 %v519, %v86
    %v596 = vmul.f32 %v521, %v87
    %v597 = vmul.f32 %v523, %v88
    %v598 = vmul.f32 %v525, %v89
    %v599 = vmul.f32 %v527, %v90
    %v600 = vsel %vm109, %v592, 0.0
    %v601 = vrot.slane %v600, 4
    %v602 = vadd.f32 %v600, %v601
    %v603 = vrot.slane %v602, 2
    %v604 = vadd.f32 %v602, %v603
    %v605 = vrot.slane %v604, 1
    %v606 = vadd.f32 %v604, %v605
    %v607 = vsel %vm109, %v593, 0.0
    %v608 = vrot.slane %v607, 4
    %v609 = vadd.f32 %v607, %v608
    %v610 = vrot.slane %v609, 2
    %v611 = vadd.f32 %v609, %v610
    %v612 = vrot.slane %v611, 1
    %v613 = vadd.f32 %v611, %v612
    %v614 = vsel %vm109, %v594, 0.0
    %v615 = vrot.slane %v614, 4
    %v616 = vadd.f32 %v614, %v615
    %v617 = vrot.slane %v616, 2
    %v618 = vadd.f32 %v616, %v617
    %v619 = vrot.slane %v618, 1
    %v620 = vadd.f32 %v618, %v619
    %v621 = vsel %vm109, %v595, 0.0
    %v622 = vrot.slane %v621, 4
    %v623 = vadd.f32 %v621, %v622
    %v624 = vrot.slane %v623, 2
    %v625 = vadd.f32 %v623, %v624
    %v626 = vrot.slane %v625, 1
    %v627 = vadd.f32 %v625, %v626
    %v628 = vsel %vm109, %v596, 0.0
    %v629 = vrot.slane %v628, 4
    %v630 = vadd.f32 %v628, %v629
    %v631 = vrot.slane %v630, 2
    %v632 = vadd.f32 %v630, %v631
    %v633 = vrot.slane %v632, 1
    %v634 = vadd.f32 %v632, %v633
    %v635 = vsel %vm109, %v597, 0.0
    %v636 = vrot.slane %v635, 4
    %v637 = vadd.f32 %v635, %v636
    %v638 = vrot.slane %v637, 2
    %v639 = vadd.f32 %v637, %v638
    %v640 = vrot.slane %v639, 1
    %v641 = vadd.f32 %v639, %v640
    %v642 = vsel %vm109, %v598, 0.0
    %v643 = vrot.slane %v642, 4
    %v644 = vadd.f32 %v642, %v643
    %v645 = vrot.slane %v644, 2
    %v646 = vadd.f32 %v644, %v645
    %v647 = vrot.slane %v646, 1
    %v648 = vadd.f32 %v646, %v647
    %v649 = vsel %vm109, %v599, 0.0
    %v650 = vrot.slane %v649, 4
    %v651 = vadd.f32 %v649, %v650
    %v652 = vrot.slane %v651, 2
    %v653 = vadd.f32 %v651, %v652
    %v654 = vrot.slane %v653, 1
    %v655 = vadd.f32 %v653, %v654
    %v656 = vmul.f32 %v606, %v606
    %v657 = vmul.f32 %v613, %v613
    %v658 = vmul.f32 %v620, %v620
    %v659 = vmul.f32 %v627, %v627
    %v660 = vmul.f32 %v634, %v634
    %v661 = vmul.f32 %v641, %v641
    %v662 = vmul.f32 %v648, %v648
    %v663 = vmul.f32 %v655, %v655
    %vm672 = vcmask 1041409
    %v673 = vsel %vm672, %v657, %v656
    %vm674 = vcmask 1042434
    %v675 = vsel %vm674, %v658, %v673
    %vm676 = vcmask 1043459
    %v677 = vsel %vm676, %v659, %v675
    %vm678 = vcmask 1044484
    %v679 = vsel %vm678, %v660, %v677
    %vm680 = vcmask 1045509
    %v681 = vsel %vm680, %v661, %v679
    %vm682 = vcmask 1046534
    %v683 = vsel %vm682, %v662, %v681
    %vm684 = vcmask 1047559
    %v685 = vsel %vm684, %v663, %v683
    %v687 = vsel %vm109, %v685, 0.0
    %688 = vadd.xlane.f32.xlu0 %v687
    %v689 = vpop.xlane.xlu0 %688
    %v690 = vrsqrt.pop %v689
    %v692 = vrot.slane %v690, 1
    %v693 = vrot.slane %v690, 2
    %v694 = vrot.slane %v690, 3
    %v695 = vrot.slane %v690, 4
    %v696 = vrot.slane %v690, 5
    %v697 = vrot.slane %v690, 6
    %v698 = vrot.slane %v690, 7
    %v707 = vmul.f32 %v606, %v690
    %v708 = vmul.f32 %v613, %v692
    %v709 = vmul.f32 %v620, %v693
    %v710 = vmul.f32 %v627, %v694
    %v711 = vmul.f32 %v634, %v695
    %v712 = vmul.f32 %v641, %v696
    %v713 = vmul.f32 %v648, %v697
    %v714 = vmul.f32 %v655, %v698
    %v723 = vrot.slane %v708, 7
    %v724 = vsel %vm672, %v723, %v707
    %v725 = vrot.slane %v709, 6
    %v726 = vsel %vm674, %v725, %v724
    %v727 = vrot.slane %v710, 5
    %v728 = vsel %vm676, %v727, %v726
    %v729 = vrot.slane %v711, 4
    %v730 = vsel %vm678, %v729, %v728
    %v731 = vrot.slane %v712, 3
    %v732 = vsel %vm680, %v731, %v730
    %v733 = vrot.slane %v713, 2
    %v734 = vsel %vm682, %v733, %v732
    %v735 = vrot.slane %v714, 1
    %v736 = vsel %vm684, %v735, %v734
    %738 = vst.msk [vmem:[#allocation10] sm:$0xff] %vm109, %v736
    %v747 = vlaneseq
    %v748 = vand.u32 %v747, 127
    %v749 = vlaneseq
    %v750 = vshrl.u32 %v749, 7
    %v751 = vsub.s32 %v748, %v750
    %v752 = vrot.slane %v577, %v751
    %v753 = vlaneseq
    %v754 = vshrl.u32 %v753, 7
    %v755 = vsub.s32 %v748, %v754
    %v756 = vrot.slane %v579, %v755
    %v757 = vlaneseq
    %v758 = vshrl.u32 %v757, 7
    %v759 = vsub.s32 %v748, %v758
    %v760 = vrot.slane %v581, %v759
    %v761 = vlaneseq
    %v762 = vshrl.u32 %v761, 7
    %v763 = vsub.s32 %v748, %v762
    %v764 = vrot.slane %v583, %v763
    %v765 = vlaneseq
    %v766 = vshrl.u32 %v765, 7
    %v767 = vsub.s32 %v748, %v766
    %v768 = vrot.slane %v585, %v767
    %v769 = vlaneseq
    %v770 = vshrl.u32 %v769, 7
    %v771 = vsub.s32 %v748, %v770
    %v772 = vrot.slane %v587, %v771
    %v773 = vlaneseq
    %v774 = vshrl.u32 %v773, 7
    %v775 = vsub.s32 %v748, %v774
    %v776 = vrot.slane %v589, %v775
    %v777 = vlaneseq
    %v778 = vshrl.u32 %v777, 7
    %v779 = vsub.s32 %v748, %v778
    %v780 = vrot.slane %v591, %v779
    %v781 = vsel %vm672, %v756, %v752
    %v782 = vsel %vm674, %v760, %v781
    %v783 = vsel %vm676, %v764, %v782
    %v784 = vsel %vm678, %v768, %v783
    %v785 = vsel %vm680, %v772, %v784
    %v786 = vsel %vm682, %v776, %v785
    %v787 = vsel %vm684, %v780, %v786
    %vm789 = vcmask 64512
    %790 = vst.msk [vmem:[#allocation11] sm:$0xff] %vm789, %v787
    // Predicated region
    $region46: #{tpu_custom_call.1} parent=1 // pred_check
      _
    $region47: #{tpu_custom_call.1} parent=1 // pred_check_branch
      %792 = sbr.rel (0) target = $region49
    $region48: #{tpu_custom_call.1} parent=1 // pred_region
      %s794 = ssub.s32 128, 128
      %795 = vsyncadd [#allocation4], %s794
      %s797 = sshll.u32 [#allocation10], 4
      %s798 = int_to_ptr.vmem [resolvable:$true] %s797
      %800 = dma.vmem_to_hbm [thread:$0]  %s798, 128, %s7, [#allocation4]
    $region49: #{tpu_custom_call.1} parent=1 // pred_fallthru
      _
    // Predicated region
    $region50: #{tpu_custom_call.1} parent=1 // pred_check
      _
    $region51: #{tpu_custom_call.1} parent=1 // pred_check_branch
      %802 = sbr.rel (0) target = $region53
    $region52: #{tpu_custom_call.1} parent=1 // pred_region
      %s804 = ssub.s32 128, 128
      %805 = vsyncadd [#allocation12], %s804
      %s807 = sshll.u32 [#allocation11], 4
      %s808 = int_to_ptr.vmem [resolvable:$true] %s807
      %810 = dma.vmem_to_hbm [thread:$0]  %s808, 128, %s8, [#allocation12]
    $region53: #{tpu_custom_call.1} parent=1 // pred_fallthru
      _
    // Predicated region
    $region54: #{tpu_custom_call.1} parent=1 // pred_check
      _
    $region55: #{tpu_custom_call.1} parent=1 // pred_check_branch
      %812 = sbr.rel (0) target = $region57
    $region56: #{tpu_custom_call.1} parent=1 // pred_region
      %813 = dma.done [#allocation4], 128
    $region57: #{tpu_custom_call.1} parent=1 // pred_fallthru
      _
    // Predicated region
    $region58: #{tpu_custom_call.1} parent=1 // pred_check
      _
    $region59: #{tpu_custom_call.1} parent=1 // pred_check_branch
      %815 = sbr.rel (0) target = $region61
    $region60: #{tpu_custom_call.1} parent=1 // pred_region
      %816 = dma.done [#allocation12], 128
    $region61: #{tpu_custom_call.1} parent=1 // pred_fallthru
      _
    %817 = vsyncpa [#allocation3], 1
    %818 = vsyncpa [#allocation6], 1
    %819 = vsyncpa [#allocation9], 1
    %820 = vsyncpa [#allocation4], 1
    %821 = vsyncpa [#allocation12], 1

</llo_original>
